<compile_context>
chip_gen: v5e
topology: v5e:2x2
jax: 0.10.0
libtpu: 0.0.40
codegen_flags: <defaults>
</compile_context>

<pallas_src>
import functools

import jax
import jax.numpy as jnp
from jax.experimental import pallas as pl
from jax.experimental.pallas import tpu as pltpu


def _round_up(x, m):
    return ((x + m - 1) // m) * m


# ---------------------------------------------------------------------------
# Pallas kernel: one fused MXU matmul (relations + root + bias) + log_softmax.
# ---------------------------------------------------------------------------
def rgcn_kernel(x_ref, w_ref, out_ref, *, valid_o):
    # (tile_n, K_pad) bf16 @ (K_pad, O_pad) bf16 -> (tile_n, O_pad) f32 on MXU.
    acc = jnp.dot(x_ref[...], w_ref[...], preferred_element_type=jnp.float32)

    # Mask padded output lanes to a large negative so they vanish in softmax.
    col = jax.lax.broadcasted_iota(jnp.int32, acc.shape, 1)
    logits = jnp.where(col < valid_o, acc, -1e30)

    # log_softmax over the (lane-dense, padded) channel dim, all in f32.
    m = jnp.max(logits, axis=-1, keepdims=True)
    z = logits - m
    lse = jnp.log(jnp.sum(jnp.exp(z), axis=-1, keepdims=True))
    out_ref[...] = (z - lse).astype(out_ref.dtype)


def rgcn_matmul_logsoftmax(x_fused, w_fused, *, valid_o, tile_n=256):
    """x_fused: (N_pad, K_pad) bf16, w_fused: (K_pad, O_pad) bf16 -> f32 log-probs."""
    n_pad, k_pad = x_fused.shape
    _, o_pad = w_fused.shape
    assert n_pad % tile_n == 0  # wrapper pads N up to a multiple of tile_n
    return pl.pallas_call(
        functools.partial(rgcn_kernel, valid_o=valid_o),
        out_shape=jax.ShapeDtypeStruct((n_pad, o_pad), jnp.float32),
        grid=(n_pad // tile_n,),
        in_specs=[
            pl.BlockSpec((tile_n, k_pad), lambda i: (i, 0)),
            # Grid-invariant weights: constant index_map -> fetched once, stays
            # VMEM-resident across grid steps.
            # TODO(synk): at production sizes (large R*I*O) DMA the weight once
            # into a scratch buffer to avoid the double-buffer VMEM cost.
            pl.BlockSpec((k_pad, o_pad), lambda i: (0, 0)),
        ],
        out_specs=pl.BlockSpec((tile_n, o_pad), lambda i: (i, 0)),
        compiler_params=pltpu.CompilerParams(
            dimension_semantics=("parallel",)),
    )(x_fused, w_fused)


# ---------------------------------------------------------------------------
# JAX glue: group_input gather and fused per-edge-type scatter-mean.
# ---------------------------------------------------------------------------
def group_input(x_dict, emb_dict, node_type, local_node_idx, in_channels):
    N = node_type.shape[0]
    h = jnp.zeros((N, in_channels), jnp.float32)
    for key, feat in x_dict.items():
        mask = (node_type == key)
        h = jnp.where(mask[:, None], feat[local_node_idx], h)
    for key, emb in emb_dict.items():
        mask = (node_type == int(key))
        h = jnp.where(mask[:, None], emb[local_node_idx], h)
    return h


def mean_aggregate_fused(x, edge_index, edge_type, num_edge_types, num_nodes):
    """Single segment_sum keyed by dst*R + edge_type -> (N, R*I)."""
    src, dst = edge_index[0], edge_index[1]
    I = x.shape[1]
    seg = dst * num_edge_types + edge_type                       # (E,)
    msg = x[src]                                                 # (E, I)
    nseg = num_nodes * num_edge_types
    sums = jax.ops.segment_sum(msg, seg, num_segments=nseg)      # (N*R, I)
    cnts = jax.ops.segment_sum(jnp.ones(edge_type.shape, x.dtype), seg,
                               num_segments=nseg)                # (N*R,)
    agg = sums / jnp.maximum(cnts, 1.0)[:, None]
    return agg.reshape(num_nodes, num_edge_types * I)            # (N, R*I)


def rgcn_forward(params, x_dict, edge_index, edge_type, node_type,
                 local_node_idx, *, tile_n=256):
    w_rel, w_root, b_root = params["w_rel"], params["w_root"], params["b_root"]
    R, I, O = w_rel.shape
    T = w_root.shape[0]
    N = node_type.shape[0]

    # Data-dependent gather + scatter-mean stay as JAX glue.
    h = group_input(x_dict, params["emb_dict"], node_type, local_node_idx, I)
    agg = mean_aggregate_fused(h, edge_index, edge_type, R, N)        # (N, R*I)
    onehot = jax.nn.one_hot(node_type, T, dtype=jnp.float32)          # (N, T)
    root_in = (onehot[:, :, None] * h[:, None, :]).reshape(N, T * I)  # (N, T*I)

    # Fused contraction operands: relations | masked root | one-hot (bias).
    x_fused = jnp.concatenate([agg, root_in, onehot], axis=-1)        # (N, K0)
    w_fused = jnp.concatenate(
        [w_rel.reshape(R * I, O), w_root.reshape(T * I, O), b_root], axis=0)

    K0 = R * I + T * I + T
    K_pad = _round_up(K0, 128)
    O_pad = _round_up(O, 128)
    N_pad = _round_up(N, tile_n)

    x_fused = jnp.pad(x_fused, ((0, N_pad - N), (0, K_pad - K0)))
    w_fused = jnp.pad(w_fused, ((0, K_pad - K0), (0, O_pad - O)))

    out_pad = rgcn_matmul_logsoftmax(x_fused.astype(jnp.bfloat16),
                                     w_fused.astype(jnp.bfloat16),
                                     valid_o=O, tile_n=tile_n)
    return out_pad[:N, :O]


# ---------------------------------------------------------------------------
# Pure-JAX f32 reference (independent per-relation glue path) for verification.
# ---------------------------------------------------------------------------
def _mean_aggregate_loop(x, edge_index, edge_type, num_edge_types, num_nodes):
    src, dst = edge_index[0], edge_index[1]
    x_src = x[src]
    aggs = []
    for e in range(num_edge_types):
        m = (edge_type == e).astype(x.dtype)
        msg = x_src * m[:, None]
        s = jax.ops.segment_sum(msg, dst, num_segments=num_nodes)
        c = jax.ops.segment_sum(m, dst, num_segments=num_nodes)
        aggs.append(s / jnp.maximum(c, 1.0)[:, None])
    return jnp.stack(aggs, axis=0)


def rgcn_forward_reference(params, x_dict, edge_index, edge_type, node_type,
                           local_node_idx):
    w_rel, w_root, b_root = params["w_rel"], params["w_root"], params["b_root"]
    R, I, O = w_rel.shape
    T = w_root.shape[0]
    N = node_type.shape[0]

    h = group_input(x_dict, params["emb_dict"], node_type, local_node_idx, I)
    agg = _mean_aggregate_loop(h, edge_index, edge_type, R, N)
    out = jnp.zeros((N, O), jnp.float32)
    for e in range(R):
        out = out + agg[e] @ w_rel[e]
    for t in range(T):
        mask = (node_type == t)[:, None].astype(jnp.float32)
        out = out + mask * (h @ w_root[t] + b_root[t])
    return jax.nn.log_softmax(out, axis=-1)


# ---------------------------------------------------------------------------
if __name__ == "__main__":
    key = jax.random.PRNGKey(0)

    # Small synthetic config consistent with the module's __init__.
    in_channels = 32
    hidden_channels = 32   # unused by the single-conv forward (I -> O directly)
    out_channels = 16
    num_layers = 1         # => no relu / dropout, exactly as in PyTorch forward
    num_node_types = 3
    num_edge_types = 4
    num_nodes_dict = {0: 40, 1: 40, 2: 40}
    x_types = [0, 1]       # node type 2 gets a learned embedding table

    N = 512                # nodes in the sampled subgraph (2 grid steps @ 256)
    E = 2048               # edges

    ks = jax.random.split(key, 10)
    scale = 0.1
    w_rel = scale * jax.random.normal(
        ks[0], (num_edge_types, in_channels, out_channels), jnp.float32)
    w_root = scale * jax.random.normal(
        ks[1], (num_node_types, in_channels, out_channels), jnp.float32)
    b_root = scale * jax.random.normal(
        ks[2], (num_node_types, out_channels), jnp.float32)
    emb_dict = {
        2: scale * jax.random.normal(ks[3], (num_nodes_dict[2], in_channels),
                                     jnp.float32)
    }
    params = dict(w_rel=w_rel, w_root=w_root, b_root=b_root, emb_dict=emb_dict)

    x_dict = {
        0: jax.random.normal(ks[4], (num_nodes_dict[0], in_channels),
                             jnp.float32),
        1: jax.random.normal(ks[5], (num_nodes_dict[1], in_channels),
                             jnp.float32),
    }

    # Sampled heterogeneous subgraph.
    node_type = jax.random.randint(ks[6], (N,), 0, num_node_types, jnp.int32)
    local_node_idx = jax.random.randint(ks[7], (N,), 0, 40, jnp.int32)
    edge_index = jax.random.randint(ks[8], (2, E), 0, N, jnp.int32)
    edge_type = jax.random.randint(ks[9], (E,), 0, num_edge_types, jnp.int32)

    out = rgcn_forward(params, x_dict, edge_index, edge_type, node_type,
                       local_node_idx, tile_n=256)
    out = jax.block_until_ready(out)

    ref = rgcn_forward_reference(params, x_dict, edge_index, edge_type,
                                 node_type, local_node_idx)
    ref = jax.block_until_ready(ref)

    assert out.shape == (N, out_channels)
    # bf16 matmul operands (f32 accumulation) vs f32 reference -> loosened tol.
    max_diff = float(jnp.max(jnp.abs(out - ref)))
    assert jnp.allclose(out, ref, rtol=3e-2, atol=3e-2), (
        f"mismatch vs reference; max abs diff = {max_diff}")
    print("KERNEL_OK")
</pallas_src>

<mosaic_0001>
module attributes {stable_mosaic.version = 11 : i64} {
  func.func @rgcn_kernel(%arg0: i32, %arg1: memref<256x256xbf16, #tpu.memory_space<vmem>>, %arg2: memref<256x128xbf16, #tpu.memory_space<vmem>>, %arg3: memref<256x128xf32, #tpu.memory_space<vmem>>) attributes {dimension_semantics = [#tpu.dimension_semantics<parallel>], iteration_bounds = array<i64: 2>, scalar_prefetch = 0 : i64, scratch_operands = 0 : i64, tpu.core_type = #tpu.core_type<tc>, window_params = [{transform_indices = @transform_0, window_bounds = array<i64: 256, 256>}, {pipeline_mode = #tpu.pipeline_mode<synchronous>, transform_indices = @transform_1, window_bounds = array<i64: 256, 128>}, {transform_indices = @transform_2, window_bounds = array<i64: 256, 128>}]} {
    %c0 = arith.constant 0 : index
    %c0_0 = arith.constant 0 : index
    %0 = vector.load %arg1[%c0, %c0_0] : memref<256x256xbf16, #tpu.memory_space<vmem>>, vector<256x256xbf16>
    %c0_1 = arith.constant 0 : index
    %c0_2 = arith.constant 0 : index
    %1 = vector.load %arg2[%c0_1, %c0_2] : memref<256x128xbf16, #tpu.memory_space<vmem>>, vector<256x128xbf16>
    %cst = arith.constant dense<0.000000e+00> : vector<256x128xf32>
    %2 = tpu.matmul %0, %1, %cst {dimension_numbers = #tpu.dot_dimension_numbers<[1], [0], [0], [1], [0, 0, 1, 1], [], []>} : vector<256x256xbf16>, vector<256x128xbf16>, vector<256x128xf32> -> vector<256x128xf32>
    %3 = tpu.iota {dimensions = array<i32: 1>} : vector<256x128xi32>
    %c16_i32 = arith.constant 16 : i32
    %4 = vector.broadcast %c16_i32 : i32 to vector<256x128xi32>
    %5 = arith.cmpi slt, %3, %4 : vector<256x128xi32>
    %cst_3 = arith.constant -1.000000e+30 : f32
    %6 = vector.broadcast %cst_3 : f32 to vector<256x128xf32>
    %7 = arith.select %5, %2, %6 : vector<256x128xi1>, vector<256x128xf32>
    %cst_4 = arith.constant dense<0xFF800000> : vector<256xf32>
    %8 = vector.multi_reduction <maximumf>, %7, %cst_4 [1] : vector<256x128xf32> to vector<256xf32>
    %9 = vector.shape_cast %8 : vector<256xf32> to vector<256x1xf32>
    %10 = vector.broadcast %9 : vector<256x1xf32> to vector<256x128xf32>
    %11 = arith.subf %7, %10 : vector<256x128xf32>
    %12 = math.exp %11 : vector<256x128xf32>
    %cst_5 = arith.constant dense<0.000000e+00> : vector<256xf32>
    %13 = vector.multi_reduction <add>, %12, %cst_5 [1] : vector<256x128xf32> to vector<256xf32>
    %14 = vector.shape_cast %13 : vector<256xf32> to vector<256x1xf32>
    %15 = math.log %14 : vector<256x1xf32>
    %16 = vector.broadcast %15 : vector<256x1xf32> to vector<256x128xf32>
    %17 = arith.subf %11, %16 : vector<256x128xf32>
    %c0_6 = arith.constant 0 : index
    %c0_7 = arith.constant 0 : index
    %18 = vector.load %arg3[%c0_6, %c0_7] : memref<256x128xf32, #tpu.memory_space<vmem>>, vector<256x128xf32>
    tpu.vector_store %arg3[%c0_6, %c0_7], %17 {strides = array<i32>} : memref<256x128xf32, #tpu.memory_space<vmem>>, vector<256x128xf32>,
    return
  }
  func.func @transform_0(%arg0: i32) -> (i32, i32) {
    %c0_i32 = arith.constant 0 : i32
    %c0_i32_0 = arith.constant 0 : i32
    return %arg0, %c0_i32 : i32, i32
  }
  func.func @transform_1(%arg0: i32) -> (i32, i32) {
    %c0_i32 = arith.constant 0 : i32
    %c0_i32_0 = arith.constant 0 : i32
    %c0_i32_1 = arith.constant 0 : i32
    return %c0_i32, %c0_i32_0 : i32, i32
  }
  func.func @transform_2(%arg0: i32) -> (i32, i32) {
    %c0_i32 = arith.constant 0 : i32
    %c0_i32_0 = arith.constant 0 : i32
    return %arg0, %c0_i32 : i32, i32
  }
}

</mosaic_0001>

<llo_original>
// kernel: tpu_custom_call.1
$region0: #{tpu_custom_call.1}
  #allocation0 [shape = 'u32[]', space=smem, size = 0x4, offset = 0x4, fixed_abs, tag = 'smem constant byte address 0x4 - core index']
  #allocation1 [shape = 'u32[72,128]{1,0:T(1,128)}', space=vmem, size = 0x9000, scoped, tag = 'internal scratch']
  %s0 = inlined_call_operand.hbm [shape: bf16[512,256], index: 0, kind: input, shape index: {}]
  %s1 = inlined_call_operand.hbm [shape: bf16[256,128], index: 1, kind: input, shape index: {}]
  %s2 = inlined_call_operand.hbm [shape: f32[512,128], index: 2, kind: output, shape index: {}]
  %s3 = sld [smem:[#allocation0]]
  $region49: #{tpu_custom_call.1} parent=0
    _
  %s5 = ssub.s32 1, %s3
  %s6 = scalar_select 0, %s5, %s3
  $region1: #{tpu_custom_call.1} parent=0
    #allocation2 [shape = 'u8[262144]{0}', space=vmem, size = 0x40000, scoped, tag = 'input window, operand 0']
    #allocation3 [shape = 's32[2]{0}', space=sflag, size = 0x8, scoped, tag = 'scoped memory for tpu_custom_call.1']
    #allocation4 [shape = 's32[2]{0}', space=sflag, size = 0x8, scoped, tag = 'scoped memory for tpu_custom_call.1']
    #allocation5 [shape = 'u8[65536]{0}', space=vmem, size = 0x10000, scoped, tag = 'input window, operand 1, single buffered']
    #allocation6 [shape = 's32[1]{0}', space=sflag, size = 0x4, scoped, tag = 'scoped memory for tpu_custom_call.1']
    #allocation7 [shape = 'u8[262144]{0}', space=vmem, size = 0x40000, scoped, tag = 'output window, operand 0']
    %7 = vsyncpa [#allocation3], 0
    %s8 = scalar_lea.sflag [#allocation3], 1
    %9 = vsyncpa %s8, 0
    %10 = vsyncpa [#allocation6], 0
    %11 = vsyncpa [#allocation4], 0
    %s12 = scalar_lea.sflag [#allocation4], 1
    %13 = vsyncpa %s12, 0
    loop: start=0, step=1, limit=4
    $region2: #{tpu_custom_call.1} parent=1 // loop_pre_header
      _
    $region3: #{tpu_custom_call.1} parent=1 // loop_header
      %s15 = sphi 0, %s19
      %p16 = scmp.ge.s32.totalorder %s15, 4
      %s25 = sphi 0, %s27
      %s28 = sphi 0, %s25
      %s29 = sphi 0, %s28
      %s45 = sphi 0, %s29
      %s49 = sphi 0, %s49
      %s51 = sphi 0, %s49
      %s52 = sphi 0, %s51
      %s66 = sphi 0, %s52
      %s72 = sphi 0, %s74
      %s75 = sphi 0, %s72
      %s76 = sphi 0, %s75
      %s92 = sphi 0, %s76
    $region4: #{tpu_custom_call.1} parent=1 // loop_header_branch
      %18 = sbr.rel (%p16) target = $region8
    $region5: #{tpu_custom_call.1} parent=1 // loop_body
      %s20 = ssub.s32 %s15, 1
      %s21 = ssub.s32 %s15, 2
      %s22 = sadd.s32 %s15, 1
      %s23 = ssub.s32 %s15, %s22
      %p24 = scmp.eq.s32.totalorder %s23, 0
      %s26 = sadd.s32 %s25, 1
      %s27 = scalar_select %p24, %s25, %s26
      %p30 = pneg %p24
      %p31 = scmp.eq.s32.totalorder %s15, 1
      %p32 = por %p30, %p31
      %p33 = scmp.ne.s32.totalorder %s25, %s28
      %p34 = scmp.eq.s32.totalorder %s15, 0
      %p35 = por %p33, %p34
      %p36 = scmp.ne.s32.totalorder %s25, %s28
      %p37 = scmp.eq.s32.totalorder %s20, 1
      %p38 = por %p36, %p37
      %p39 = scmp.ne.s32.totalorder %s28, %s29
      %p40 = scmp.eq.s32.totalorder %s20, 0
      %p41 = por %p39, %p40
      %p42 = scmp.ne.s32.totalorder %s28, %s29
      %p43 = scmp.eq.s32.totalorder %s21, 1
      %p44 = por %p42, %p43
      %p46 = scmp.ne.s32.totalorder %s29, %s45
      %p47 = scmp.eq.s32.totalorder %s21, 0
      %p48 = por %p46, %p47
      %s50 = sadd.s32 %s49, 1
      %p53 = scmp.eq.s32.totalorder %s15, 1
      %p54 = scmp.ne.s32.totalorder %s49, %s51
      %p55 = scmp.eq.s32.totalorder %s15, 0
      %p56 = por %p54, %p55
      %p57 = scmp.ne.s32.totalorder %s49, %s51
      %p58 = scmp.eq.s32.totalorder %s20, 1
      %p59 = por %p57, %p58
      %p60 = scmp.ne.s32.totalorder %s51, %s52
      %p61 = scmp.eq.s32.totalorder %s20, 0
      %p62 = por %p60, %p61
      %p63 = scmp.ne.s32.totalorder %s51, %s52
      %p64 = scmp.eq.s32.totalorder %s21, 1
      %p65 = por %p63, %p64
      %p67 = scmp.ne.s32.totalorder %s52, %s66
      %p68 = scmp.eq.s32.totalorder %s21, 0
      %p69 = por %p67, %p68
      %s70 = ssub.s32 %s15, %s22
      %p71 = scmp.eq.s32.totalorder %s70, 0
      %s73 = sadd.s32 %s72, 1
      %s74 = scalar_select %p71, %s72, %s73
      %p77 = pneg %p71
      %p78 = scmp.eq.s32.totalorder %s15, 1
      %p79 = por %p77, %p78
      %p80 = scmp.ne.s32.totalorder %s72, %s75
      %p81 = scmp.eq.s32.totalorder %s15, 0
      %p82 = por %p80, %p81
      %p83 = scmp.ne.s32.totalorder %s72, %s75
      %p84 = scmp.eq.s32.totalorder %s20, 1
      %p85 = por %p83, %p84
      %p86 = scmp.ne.s32.totalorder %s75, %s76
      %p87 = scmp.eq.s32.totalorder %s20, 0
      %p88 = por %p86, %p87
      %p89 = scmp.ne.s32.totalorder %s75, %s76
      %p90 = scmp.eq.s32.totalorder %s21, 1
      %p91 = por %p89, %p90
      %p93 = scmp.ne.s32.totalorder %s76, %s92
      %p94 = scmp.eq.s32.totalorder %s21, 0
      %p95 = por %p93, %p94
      %p96 = scmp.le.s32.totalorder 1, %s15
      %p97 = scmp.lt.s32.totalorder %s15, 3
      %p98 = pnand %p96, %p97
      %p99 = pneg %p98
      // Predicated region
      $region9: #{tpu_custom_call.1} parent=5 // pred_check
        _
      $region10: #{tpu_custom_call.1} parent=5 // pred_check_branch
        %101 = sbr.rel (%p98) target = $region12
      $region11: #{tpu_custom_call.1} parent=5 // pred_region
        %s102 = ssub.s32 %s15, 1
        // Predicated region
        $region13: #{tpu_custom_call.1} parent=11 // pred_check
          %p103 = pneg %p62
        $region14: #{tpu_custom_call.1} parent=11 // pred_check_branch
          %105 = sbr.rel (%p103) target = $region16
        $region15: #{tpu_custom_call.1} parent=11 // pred_region
          %107 = vsyncadd [#allocation6], 0
          %s108 = sshll.u32 %s1, 4
          %s109 = int_to_ptr.hbm [resolvable:$true] %s108
          %s110 = sshll.u32 [#allocation5], 4
          %s111 = int_to_ptr.vmem [resolvable:$true] %s110
          %116 = dma.hbm_to_vmem [thread:$0]  %s109, 2048, %s111, [#allocation6], 64, 64, 4
        $region16: #{tpu_custom_call.1} parent=11 // pred_fallthru
          _
      $region12: #{tpu_custom_call.1} parent=5 // pred_fallthru
        _
      %p117 = scmp.lt.s32.totalorder %s15, 2
      // Predicated region
      $region17: #{tpu_custom_call.1} parent=5 // pred_check
        %p118 = pneg %p117
      $region18: #{tpu_custom_call.1} parent=5 // pred_check_branch
        %120 = sbr.rel (%p118) target = $region20
      $region19: #{tpu_custom_call.1} parent=5 // pred_region
        // Predicated region
        $region21: #{tpu_custom_call.1} parent=19 // pred_check
          %p121 = pneg %p35
        $region22: #{tpu_custom_call.1} parent=19 // pred_check_branch
          %123 = sbr.rel (%p121) target = $region24
        $region23: #{tpu_custom_call.1} parent=19 // pred_region
          %s124 = sand.u32 %s25, 1
          %s125 = scalar_lea.sflag [#allocation3], %s124
          %s126 = sand.u32 %s25, 1
          %s127 = smul.addr %s126, 256
          %s128 = scalar_lea.vmem [#allocation2], %s127
          %s129 = smul.u32 32, %s15
          %131 = vsyncadd %s125, 0
          %s132 = smul.addr %s129, 2
          %s133 = smul.addr %s132, 4
          %s134 = scalar_lea.hbm %s0, %s133
          %s135 = sshll.u32 %s134, 4
          %s136 = int_to_ptr.hbm [resolvable:$true] %s135
          %s137 = sshll.u32 %s128, 4
          %s138 = int_to_ptr.vmem [resolvable:$true] %s137
          %143 = dma.hbm_to_vmem [thread:$0]  %s136, 4096, %s138, %s125, 128, 128, 8
        $region24: #{tpu_custom_call.1} parent=19 // pred_fallthru
          _
      $region20: #{tpu_custom_call.1} parent=5 // pred_fallthru
        _
      %p144 = scmp.le.s32.totalorder 1, %s15
      %p145 = scmp.lt.s32.totalorder %s15, 3
      %p146 = pnand %p144, %p145
      %p147 = pneg %p146
      // Predicated region
      $region25: #{tpu_custom_call.1} parent=5 // pred_check
        _
      $region26: #{tpu_custom_call.1} parent=5 // pred_check_branch
        %149 = sbr.rel (%p146) target = $region28
      $region27: #{tpu_custom_call.1} parent=5 // pred_region
        %s150 = ssub.s32 %s15, 1
        %s151 = sand.u32 %s28, 1
        %s152 = scalar_lea.sflag [#allocation3], %s151
        %s153 = sand.u32 %s28, 1
        %s154 = smul.addr %s153, 256
        %s155 = scalar_lea.vmem [#allocation2], %s154
        // Predicated region
        $region29: #{tpu_custom_call.1} parent=27 // pred_check
          %p156 = pneg %p41
        $region30: #{tpu_custom_call.1} parent=27 // pred_check_branch
          %158 = sbr.rel (%p156) target = $region32
        $region31: #{tpu_custom_call.1} parent=27 // pred_region
          %160 = dma.done %s152, 4096
        $region32: #{tpu_custom_call.1} parent=27 // pred_fallthru
          _
        // Predicated region
        $region33: #{tpu_custom_call.1} parent=27 // pred_check
          %p161 = pneg %p62
        $region34: #{tpu_custom_call.1} parent=27 // pred_check_branch
          %163 = sbr.rel (%p161) target = $region36
        $region35: #{tpu_custom_call.1} parent=27 // pred_region
          %165 = dma.done [#allocation6], 2048
        $region36: #{tpu_custom_call.1} parent=27 // pred_fallthru
          _
        %s166 = sand.u32 %s28, 1
        %s167 = scalar_lea.sflag [#allocation3], %s166
        %s168 = sand.u32 %s28, 1
        %s169 = smul.addr %s168, 256
        %s170 = scalar_lea.vmem [#allocation2], %s169
        %p171 = pneg %p41
        %p172 = pneg %p38
        %p173 = pneg %p62
        %p174 = pneg %p59
        %p175 = pneg %p88
        %p176 = pneg %p85
        %s177 = sand.u32 %s75, 1
        %s178 = scalar_lea.sflag [#allocation4], %s177
        %s179 = sand.u32 %s75, 1
        %s180 = smul.addr %s179, 256
        %s181 = scalar_lea.vmem [#allocation7], %s180
        %s182 = smul.u32 32, %s20
        %s183 = smul.u32 32, %s20
        %v184 = vld [vmem:[%s155] sm:$0xff]
        %v185 = vld [vmem:[%s155 + $0x8] sm:$0xff]
        %v186 = vld [vmem:[%s155 + $0x10] sm:$0xff]
        %v187 = vld [vmem:[%s155 + $0x18] sm:$0xff]
        %v188 = vld [vmem:[%s155 + $0x20] sm:$0xff]
        %v189 = vld [vmem:[%s155 + $0x28] sm:$0xff]
        %v190 = vld [vmem:[%s155 + $0x30] sm:$0xff]
        %v191 = vld [vmem:[%s155 + $0x38] sm:$0xff]
        %v192 = vld [vmem:[%s155 + $0x40] sm:$0xff]
        %v193 = vld [vmem:[%s155 + $0x48] sm:$0xff]
        %v194 = vld [vmem:[%s155 + $0x50] sm:$0xff]
        %v195 = vld [vmem:[%s155 + $0x58] sm:$0xff]
        %v196 = vld [vmem:[%s155 + $0x60] sm:$0xff]
        %v197 = vld [vmem:[%s155 + $0x68] sm:$0xff]
        %v198 = vld [vmem:[%s155 + $0x70] sm:$0xff]
        %v199 = vld [vmem:[%s155 + $0x78] sm:$0xff]
        %v200 = vld [vmem:[%s155 + $0x80] sm:$0xff]
        %v201 = vld [vmem:[%s155 + $0x88] sm:$0xff]
        %v202 = vld [vmem:[%s155 + $0x90] sm:$0xff]
        %v203 = vld [vmem:[%s155 + $0x98] sm:$0xff]
        %v204 = vld [vmem:[%s155 + $0xa0] sm:$0xff]
        %v205 = vld [vmem:[%s155 + $0xa8] sm:$0xff]
        %v206 = vld [vmem:[%s155 + $0xb0] sm:$0xff]
        %v207 = vld [vmem:[%s155 + $0xb8] sm:$0xff]
        %v208 = vld [vmem:[%s155 + $0xc0] sm:$0xff]
        %v209 = vld [vmem:[%s155 + $0xc8] sm:$0xff]
        %v210 = vld [vmem:[%s155 + $0xd0] sm:$0xff]
        %v211 = vld [vmem:[%s155 + $0xd8] sm:$0xff]
        %v212 = vld [vmem:[%s155 + $0xe0] sm:$0xff]
        %v213 = vld [vmem:[%s155 + $0xe8] sm:$0xff]
        %v214 = vld [vmem:[%s155 + $0xf0] sm:$0xff]
        %v215 = vld [vmem:[%s155 + $0xf8] sm:$0xff]
        %v216 = vld [vmem:[#allocation5] sm:$0xf]
        %v217 = vld [vmem:[#allocation5 + $0x4] sm:$0xf]
        %v218 = vld [vmem:[#allocation5 + $0x8] sm:$0xf]
        %v219 = vld [vmem:[#allocation5 + $0xc] sm:$0xf]
        %v220 = vld [vmem:[#allocation5 + $0x10] sm:$0xf]
        %v221 = vld [vmem:[#allocation5 + $0x14] sm:$0xf]
        %v222 = vld [vmem:[#allocation5 + $0x18] sm:$0xf]
        %v223 = vld [vmem:[#allocation5 + $0x1c] sm:$0xf]
        %v224 = vld [vmem:[#allocation5 + $0x20] sm:$0xf]
        %v225 = vld [vmem:[#allocation5 + $0x24] sm:$0xf]
        %v226 = vld [vmem:[#allocation5 + $0x28] sm:$0xf]
        %v227 = vld [vmem:[#allocation5 + $0x2c] sm:$0xf]
        %v228 = vld [vmem:[#allocation5 + $0x30] sm:$0xf]
        %v229 = vld [vmem:[#allocation5 + $0x34] sm:$0xf]
        %v230 = vld [vmem:[#allocation5 + $0x38] sm:$0xf]
        %v231 = vld [vmem:[#allocation5 + $0x3c] sm:$0xf]
        %v232 = vld [vmem:[#allocation5 + $0x40] sm:$0xf]
        %v233 = vld [vmem:[#allocation5 + $0x44] sm:$0xf]
        %v234 = vld [vmem:[#allocation5 + $0x48] sm:$0xf]
        %v235 = vld [vmem:[#allocation5 + $0x4c] sm:$0xf]
        %v236 = vld [vmem:[#allocation5 + $0x50] sm:$0xf]
        %v237 = vld [vmem:[#allocation5 + $0x54] sm:$0xf]
        %v238 = vld [vmem:[#allocation5 + $0x58] sm:$0xf]
        %v239 = vld [vmem:[#allocation5 + $0x5c] sm:$0xf]
        %v240 = vld [vmem:[#allocation5 + $0x60] sm:$0xf]
        %v241 = vld [vmem:[#allocation5 + $0x64] sm:$0xf]
        %v242 = vld [vmem:[#allocation5 + $0x68] sm:$0xf]
        %v243 = vld [vmem:[#allocation5 + $0x6c] sm:$0xf]
        %v244 = vld [vmem:[#allocation5 + $0x70] sm:$0xf]
        %v245 = vld [vmem:[#allocation5 + $0x74] sm:$0xf]
        %v246 = vld [vmem:[#allocation5 + $0x78] sm:$0xf]
        %v247 = vld [vmem:[#allocation5 + $0x7c] sm:$0xf]
        %v280 = vunpack.c.l.b16 %v184
        %v281 = vunpack.c.h.b16 %v184
        %v282 = vunpack.c.l.b16 %v185
        %v283 = vunpack.c.h.b16 %v185
        %v284 = vunpack.c.l.b16 %v186
        %v285 = vunpack.c.h.b16 %v186
        %v286 = vunpack.c.l.b16 %v187
        %v287 = vunpack.c.h.b16 %v187
        %v288 = vunpack.c.l.b16 %v188
        %v289 = vunpack.c.h.b16 %v188
        %v290 = vunpack.c.l.b16 %v189
        %v291 = vunpack.c.h.b16 %v189
        %v292 = vunpack.c.l.b16 %v190
        %v293 = vunpack.c.h.b16 %v190
        %v294 = vunpack.c.l.b16 %v191
        %v295 = vunpack.c.h.b16 %v191
        %v296 = vunpack.c.l.b16 %v192
        %v297 = vunpack.c.h.b16 %v192
        %v298 = vunpack.c.l.b16 %v193
        %v299 = vunpack.c.h.b16 %v193
        %v300 = vunpack.c.l.b16 %v194
        %v301 = vunpack.c.h.b16 %v194
        %v302 = vunpack.c.l.b16 %v195
        %v303 = vunpack.c.h.b16 %v195
        %v304 = vunpack.c.l.b16 %v196
        %v305 = vunpack.c.h.b16 %v196
        %v306 = vunpack.c.l.b16 %v197
        %v307 = vunpack.c.h.b16 %v197
        %v308 = vunpack.c.l.b16 %v198
        %v309 = vunpack.c.h.b16 %v198
        %v310 = vunpack.c.l.b16 %v199
        %v311 = vunpack.c.h.b16 %v199
        %v312 = vunpack.c.l.b16 %v200
        %v313 = vunpack.c.h.b16 %v200
        %v314 = vunpack.c.l.b16 %v201
        %v315 = vunpack.c.h.b16 %v201
        %v316 = vunpack.c.l.b16 %v202
        %v317 = vunpack.c.h.b16 %v202
        %v318 = vunpack.c.l.b16 %v203
        %v319 = vunpack.c.h.b16 %v203
        %v320 = vunpack.c.l.b16 %v204
        %v321 = vunpack.c.h.b16 %v204
        %v322 = vunpack.c.l.b16 %v205
        %v323 = vunpack.c.h.b16 %v205
        %v324 = vunpack.c.l.b16 %v206
        %v325 = vunpack.c.h.b16 %v206
        %v326 = vunpack.c.l.b16 %v207
        %v327 = vunpack.c.h.b16 %v207
        %v328 = vunpack.c.l.b16 %v208
        %v329 = vunpack.c.h.b16 %v208
        %v330 = vunpack.c.l.b16 %v209
        %v331 = vunpack.c.h.b16 %v209
        %v332 = vunpack.c.l.b16 %v210
        %v333 = vunpack.c.h.b16 %v210
        %v334 = vunpack.c.l.b16 %v211
        %v335 = vunpack.c.h.b16 %v211
        %v336 = vunpack.c.l.b16 %v212
        %v337 = vunpack.c.h.b16 %v212
        %v338 = vunpack.c.l.b16 %v213
        %v339 = vunpack.c.h.b16 %v213
        %v340 = vunpack.c.l.b16 %v214
        %v341 = vunpack.c.h.b16 %v214
        %v342 = vunpack.c.l.b16 %v215
        %v343 = vunpack.c.h.b16 %v215
        %v344 = vpack.c.b16 %v282, %v280
        %v345 = vpack.c.b16 %v283, %v281
        %v346 = vpack.c.b16 %v286, %v284
        %v347 = vpack.c.b16 %v287, %v285
        %v348 = vpack.c.b16 %v290, %v288
        %v349 = vpack.c.b16 %v291, %v289
        %v350 = vpack.c.b16 %v294, %v292
        %v351 = vpack.c.b16 %v295, %v293
        %v352 = vpack.c.b16 %v298, %v296
        %v353 = vpack.c.b16 %v299, %v297
        %v354 = vpack.c.b16 %v302, %v300
        %v355 = vpack.c.b16 %v303, %v301
        %v356 = vpack.c.b16 %v306, %v304
        %v357 = vpack.c.b16 %v307, %v305
        %v358 = vpack.c.b16 %v310, %v308
        %v359 = vpack.c.b16 %v311, %v309
        %v360 = vpack.c.b16 %v314, %v312
        %v361 = vpack.c.b16 %v315, %v313
        %v362 = vpack.c.b16 %v318, %v316
        %v363 = vpack.c.b16 %v319, %v317
        %v364 = vpack.c.b16 %v322, %v320
        %v365 = vpack.c.b16 %v323, %v321
        %v366 = vpack.c.b16 %v326, %v324
        %v367 = vpack.c.b16 %v327, %v325
        %v368 = vpack.c.b16 %v330, %v328
        %v369 = vpack.c.b16 %v331, %v329
        %v370 = vpack.c.b16 %v334, %v332
        %v371 = vpack.c.b16 %v335, %v333
        %v372 = vpack.c.b16 %v338, %v336
        %v373 = vpack.c.b16 %v339, %v337
        %v374 = vpack.c.b16 %v342, %v340
        %v375 = vpack.c.b16 %v343, %v341
        %v440 = vunpack.c.l.b16 %v216
        %v441 = vunpack.c.l.b16 %v217
        %v442 = vunpack.c.l.b16 %v218
        %v443 = vunpack.c.l.b16 %v219
        %v444 = vunpack.c.l.b16 %v220
        %v445 = vunpack.c.l.b16 %v221
        %v446 = vunpack.c.l.b16 %v222
        %v447 = vunpack.c.l.b16 %v223
        %v448 = vunpack.c.l.b16 %v224
        %v449 = vunpack.c.l.b16 %v225
        %v450 = vunpack.c.l.b16 %v226
        %v451 = vunpack.c.l.b16 %v227
        %v452 = vunpack.c.l.b16 %v228
        %v453 = vunpack.c.l.b16 %v229
        %v454 = vunpack.c.l.b16 %v230
        %v455 = vunpack.c.l.b16 %v231
        %v456 = vunpack.c.l.b16 %v232
        %v457 = vunpack.c.l.b16 %v233
        %v458 = vunpack.c.l.b16 %v234
        %v459 = vunpack.c.l.b16 %v235
        %v460 = vunpack.c.l.b16 %v236
        %v461 = vunpack.c.l.b16 %v237
        %v462 = vunpack.c.l.b16 %v238
        %v463 = vunpack.c.l.b16 %v239
        %v464 = vunpack.c.l.b16 %v240
        %v465 = vunpack.c.l.b16 %v241
        %v466 = vunpack.c.l.b16 %v242
        %v467 = vunpack.c.l.b16 %v243
        %v468 = vunpack.c.l.b16 %v244
        %v469 = vunpack.c.l.b16 %v245
        %v470 = vunpack.c.l.b16 %v246
        %v471 = vunpack.c.l.b16 %v247
        %v472 = vpack.c.b16 %v441, %v440
        %v473 = vpack.c.b16 %v443, %v442
        %v474 = vpack.c.b16 %v445, %v444
        %v475 = vpack.c.b16 %v447, %v446
        %v476 = vpack.c.b16 %v449, %v448
        %v477 = vpack.c.b16 %v451, %v450
        %v478 = vpack.c.b16 %v453, %v452
        %v479 = vpack.c.b16 %v455, %v454
        %v480 = vpack.c.b16 %v457, %v456
        %v481 = vpack.c.b16 %v459, %v458
        %v482 = vpack.c.b16 %v461, %v460
        %v483 = vpack.c.b16 %v463, %v462
        %v484 = vpack.c.b16 %v465, %v464
        %v485 = vpack.c.b16 %v467, %v466
        %v486 = vpack.c.b16 %v469, %v468
        %v487 = vpack.c.b16 %v471, %v470
        %504 = vmatpush.bf16.msra.mxu0 %v479
        %505 = vmatpush.bf16.msra.mxu0 %v478
        %506 = vmatpush.bf16.msra.mxu0 %v477
        %507 = vmatpush.bf16.msra.mxu0 %v476
        %508 = vmatpush.bf16.msra.mxu0 %v475
        %509 = vmatpush.bf16.msra.mxu0 %v474
        %510 = vmatpush.bf16.msra.mxu0 %v473
        %511 = vmatpush.bf16.msra.mxu0 %v472
        %512 = vmatmul.bf16.gmra.mxu0 %v344
        %v513 = vpop.f32.mrf.mxu0
        %v514 = vadd.f32 0.0, %v513
        %v515 = vpop.f32.mrf.mxu0
        %v516 = vadd.f32 0.0, %v515
        %517 = vmatmul.bf16.gmra.mxu0 %v346
        %v518 = vpop.f32.mrf.mxu0
        %v519 = vadd.f32 0.0, %v518
        %v520 = vpop.f32.mrf.mxu0
        %v521 = vadd.f32 0.0, %v520
        %522 = vmatmul.bf16.gmra.mxu0 %v348
        %v523 = vpop.f32.mrf.mxu0
        %v524 = vadd.f32 0.0, %v523
        %v525 = vpop.f32.mrf.mxu0
        %v526 = vadd.f32 0.0, %v525
        %527 = vmatmul.bf16.gmra.mxu0 %v350
        %v528 = vpop.f32.mrf.mxu0
        %v529 = vadd.f32 0.0, %v528
        %v530 = vpop.f32.mrf.mxu0
        %v531 = vadd.f32 0.0, %v530
        %532 = vmatmul.bf16.gmra.mxu0 %v352
        %v533 = vpop.f32.mrf.mxu0
        %v534 = vadd.f32 0.0, %v533
        %v535 = vpop.f32.mrf.mxu0
        %v536 = vadd.f32 0.0, %v535
        %537 = vmatmul.bf16.gmra.mxu0 %v354
        %v538 = vpop.f32.mrf.mxu0
        %v539 = vadd.f32 0.0, %v538
        %v540 = vpop.f32.mrf.mxu0
        %v541 = vadd.f32 0.0, %v540
        %542 = vmatmul.bf16.gmra.mxu0 %v356
        %v543 = vpop.f32.mrf.mxu0
        %v544 = vadd.f32 0.0, %v543
        %v545 = vpop.f32.mrf.mxu0
        %v546 = vadd.f32 0.0, %v545
        %547 = vmatmul.bf16.gmra.mxu0 %v358
        %v548 = vpop.f32.mrf.mxu0
        %v549 = vadd.f32 0.0, %v548
        %v550 = vpop.f32.mrf.mxu0
        %v551 = vadd.f32 0.0, %v550
        %552 = vmatmul.bf16.gmra.mxu0 %v360
        %v553 = vpop.f32.mrf.mxu0
        %v554 = vadd.f32 0.0, %v553
        %v555 = vpop.f32.mrf.mxu0
        %v556 = vadd.f32 0.0, %v555
        %557 = vmatmul.bf16.gmra.mxu0 %v362
        %v558 = vpop.f32.mrf.mxu0
        %v559 = vadd.f32 0.0, %v558
        %v560 = vpop.f32.mrf.mxu0
        %v561 = vadd.f32 0.0, %v560
        %562 = vmatmul.bf16.gmra.mxu0 %v364
        %v563 = vpop.f32.mrf.mxu0
        %v564 = vadd.f32 0.0, %v563
        %v565 = vpop.f32.mrf.mxu0
        %v566 = vadd.f32 0.0, %v565
        %567 = vmatmul.bf16.gmra.mxu0 %v366
        %v568 = vpop.f32.mrf.mxu0
        %v569 = vadd.f32 0.0, %v568
        %v570 = vpop.f32.mrf.mxu0
        %v571 = vadd.f32 0.0, %v570
        %572 = vmatmul.bf16.gmra.mxu0 %v368
        %v573 = vpop.f32.mrf.mxu0
        %v574 = vadd.f32 0.0, %v573
        %v575 = vpop.f32.mrf.mxu0
        %v576 = vadd.f32 0.0, %v575
        %577 = vmatmul.bf16.gmra.mxu0 %v370
        %v578 = vpop.f32.mrf.mxu0
        %v579 = vadd.f32 0.0, %v578
        %v580 = vpop.f32.mrf.mxu0
        %v581 = vadd.f32 0.0, %v580
        %582 = vmatmul.bf16.gmra.mxu0 %v372
        %v583 = vpop.f32.mrf.mxu0
        %v584 = vadd.f32 0.0, %v583
        %v585 = vpop.f32.mrf.mxu0
        %v586 = vadd.f32 0.0, %v585
        %587 = vmatmul.bf16.gmra.mxu0 %v374
        %v588 = vpop.f32.mrf.mxu0
        %v589 = vadd.f32 0.0, %v588
        %v590 = vpop.f32.mrf.mxu0
        %v591 = vadd.f32 0.0, %v590
        %592 = vdwg.mxu0
        %593 = vmatpush.bf16.msra.mxu0 %v487
        %594 = vmatpush.bf16.msra.mxu0 %v486
        %595 = vmatpush.bf16.msra.mxu0 %v485
        %596 = vmatpush.bf16.msra.mxu0 %v484
        %597 = vmatpush.bf16.msra.mxu0 %v483
        %598 = vmatpush.bf16.msra.mxu0 %v482
        %599 = vmatpush.bf16.msra.mxu0 %v481
        %600 = vmatpush.bf16.msra.mxu0 %v480
        %601 = vmatmul.bf16.gmra.mxu0 %v345
        %v602 = vpop.f32.mrf.mxu0
        %v603 = vadd.f32 %v514, %v602
        %v604 = vpop.f32.mrf.mxu0
        %v605 = vadd.f32 %v516, %v604
        %606 = vmatmul.bf16.gmra.mxu0 %v347
        %v607 = vpop.f32.mrf.mxu0
        %v608 = vadd.f32 %v519, %v607
        %v609 = vpop.f32.mrf.mxu0
        %v610 = vadd.f32 %v521, %v609
        %611 = vmatmul.bf16.gmra.mxu0 %v349
        %v612 = vpop.f32.mrf.mxu0
        %v613 = vadd.f32 %v524, %v612
        %v614 = vpop.f32.mrf.mxu0
        %v615 = vadd.f32 %v526, %v614
        %616 = vmatmul.bf16.gmra.mxu0 %v351
        %v617 = vpop.f32.mrf.mxu0
        %v618 = vadd.f32 %v529, %v617
        %v619 = vpop.f32.mrf.mxu0
        %v620 = vadd.f32 %v531, %v619
        %621 = vmatmul.bf16.gmra.mxu0 %v353
        %v622 = vpop.f32.mrf.mxu0
        %v623 = vadd.f32 %v534, %v622
        %v624 = vpop.f32.mrf.mxu0
        %v625 = vadd.f32 %v536, %v624
        %626 = vmatmul.bf16.gmra.mxu0 %v355
        %v627 = vpop.f32.mrf.mxu0
        %v628 = vadd.f32 %v539, %v627
        %v629 = vpop.f32.mrf.mxu0
        %v630 = vadd.f32 %v541, %v629
        %631 = vmatmul.bf16.gmra.mxu0 %v357
        %v632 = vpop.f32.mrf.mxu0
        %v633 = vadd.f32 %v544, %v632
        %v634 = vpop.f32.mrf.mxu0
        %v635 = vadd.f32 %v546, %v634
        %636 = vmatmul.bf16.gmra.mxu0 %v359
        %v637 = vpop.f32.mrf.mxu0
        %v638 = vadd.f32 %v549, %v637
        %v639 = vpop.f32.mrf.mxu0
        %v640 = vadd.f32 %v551, %v639
        %641 = vmatmul.bf16.gmra.mxu0 %v361
        %v642 = vpop.f32.mrf.mxu0
        %v643 = vadd.f32 %v554, %v642
        %v644 = vpop.f32.mrf.mxu0
        %v645 = vadd.f32 %v556, %v644
        %646 = vmatmul.bf16.gmra.mxu0 %v363
        %v647 = vpop.f32.mrf.mxu0
        %v648 = vadd.f32 %v559, %v647
        %v649 = vpop.f32.mrf.mxu0
        %v650 = vadd.f32 %v561, %v649
        %651 = vmatmul.bf16.gmra.mxu0 %v365
        %v652 = vpop.f32.mrf.mxu0
        %v653 = vadd.f32 %v564, %v652
        %v654 = vpop.f32.mrf.mxu0
        %v655 = vadd.f32 %v566, %v654
        %656 = vmatmul.bf16.gmra.mxu0 %v367
        %v657 = vpop.f32.mrf.mxu0
        %v658 = vadd.f32 %v569, %v657
        %v659 = vpop.f32.mrf.mxu0
        %v660 = vadd.f32 %v571, %v659
        %661 = vmatmul.bf16.gmra.mxu0 %v369
        %v662 = vpop.f32.mrf.mxu0
        %v663 = vadd.f32 %v574, %v662
        %v664 = vpop.f32.mrf.mxu0
        %v665 = vadd.f32 %v576, %v664
        %666 = vmatmul.bf16.gmra.mxu0 %v371
        %v667 = vpop.f32.mrf.mxu0
        %v668 = vadd.f32 %v579, %v667
        %v669 = vpop.f32.mrf.mxu0
        %v670 = vadd.f32 %v581, %v669
        %671 = vmatmul.bf16.gmra.mxu0 %v373
        %v672 = vpop.f32.mrf.mxu0
        %v673 = vadd.f32 %v584, %v672
        %v674 = vpop.f32.mrf.mxu0
        %v675 = vadd.f32 %v586, %v674
        %676 = vmatmul.bf16.gmra.mxu0 %v375
        %v677 = vpop.f32.mrf.mxu0
        %v678 = vadd.f32 %v589, %v677
        %v679 = vpop.f32.mrf.mxu0
        %v680 = vadd.f32 %v591, %v679
        %681 = vdwg.mxu0
        %v682 = vlaneseq
        %v683 = vand.u32 %v682, 127
        %vm684 = vcmp.lt.s32.totalorder %v683, 16
        %v685 = vsel %vm684, %v603, -1e+30
        %v686 = vsel %vm684, %v605, -1e+30
        %v687 = vsel %vm684, %v608, -1e+30
        %v688 = vsel %vm684, %v610, -1e+30
        %v689 = vsel %vm684, %v613, -1e+30
        %v690 = vsel %vm684, %v615, -1e+30
        %v691 = vsel %vm684, %v618, -1e+30
        %v692 = vsel %vm684, %v620, -1e+30
        %v693 = vsel %vm684, %v623, -1e+30
        %v694 = vsel %vm684, %v625, -1e+30
        %v695 = vsel %vm684, %v628, -1e+30
        %v696 = vsel %vm684, %v630, -1e+30
        %v697 = vsel %vm684, %v633, -1e+30
        %v698 = vsel %vm684, %v635, -1e+30
        %v699 = vsel %vm684, %v638, -1e+30
        %v700 = vsel %vm684, %v640, -1e+30
        %v701 = vsel %vm684, %v643, -1e+30
        %v702 = vsel %vm684, %v645, -1e+30
        %v703 = vsel %vm684, %v648, -1e+30
        %v704 = vsel %vm684, %v650, -1e+30
        %v705 = vsel %vm684, %v653, -1e+30
        %v706 = vsel %vm684, %v655, -1e+30
        %v707 = vsel %vm684, %v658, -1e+30
        %v708 = vsel %vm684, %v660, -1e+30
        %v709 = vsel %vm684, %v663, -1e+30
        %v710 = vsel %vm684, %v665, -1e+30
        %v711 = vsel %vm684, %v668, -1e+30
        %v712 = vsel %vm684, %v670, -1e+30
        %v713 = vsel %vm684, %v673, -1e+30
        %v714 = vsel %vm684, %v675, -1e+30
        %v715 = vsel %vm684, %v678, -1e+30
        %v716 = vsel %vm684, %v680, -1e+30
        %717 = vmax.xlane.f32.xlu0 %v685
        %v718 = vpop.xlane.xlu0 %717
        %719 = vmax.xlane.f32.xlu0 %v686
        %v720 = vpop.xlane.xlu0 %719
        %721 = vmax.xlane.f32.xlu0 %v687
        %v722 = vpop.xlane.xlu0 %721
        %723 = vmax.xlane.f32.xlu0 %v688
        %v724 = vpop.xlane.xlu0 %723
        %725 = vmax.xlane.f32.xlu0 %v689
        %v726 = vpop.xlane.xlu0 %725
        %727 = vmax.xlane.f32.xlu0 %v690
        %v728 = vpop.xlane.xlu0 %727
        %729 = vmax.xlane.f32.xlu0 %v691
        %v730 = vpop.xlane.xlu0 %729
        %731 = vmax.xlane.f32.xlu0 %v692
        %v732 = vpop.xlane.xlu0 %731
        %733 = vmax.xlane.f32.xlu0 %v693
        %v734 = vpop.xlane.xlu0 %733
        %735 = vmax.xlane.f32.xlu0 %v694
        %v736 = vpop.xlane.xlu0 %735
        %737 = vmax.xlane.f32.xlu0 %v695
        %v738 = vpop.xlane.xlu0 %737
        %739 = vmax.xlane.f32.xlu0 %v696
        %v740 = vpop.xlane.xlu0 %739
        %741 = vmax.xlane.f32.xlu0 %v697
        %v742 = vpop.xlane.xlu0 %741
        %743 = vmax.xlane.f32.xlu0 %v698
        %v744 = vpop.xlane.xlu0 %743
        %745 = vmax.xlane.f32.xlu0 %v699
        %v746 = vpop.xlane.xlu0 %745
        %747 = vmax.xlane.f32.xlu0 %v700
        %v748 = vpop.xlane.xlu0 %747
        %749 = vmax.xlane.f32.xlu0 %v701
        %v750 = vpop.xlane.xlu0 %749
        %751 = vmax.xlane.f32.xlu0 %v702
        %v752 = vpop.xlane.xlu0 %751
        %753 = vmax.xlane.f32.xlu0 %v703
        %v754 = vpop.xlane.xlu0 %753
        %755 = vmax.xlane.f32.xlu0 %v704
        %v756 = vpop.xlane.xlu0 %755
        %757 = vmax.xlane.f32.xlu0 %v705
        %v758 = vpop.xlane.xlu0 %757
        %759 = vmax.xlane.f32.xlu0 %v706
        %v760 = vpop.xlane.xlu0 %759
        %761 = vmax.xlane.f32.xlu0 %v707
        %v762 = vpop.xlane.xlu0 %761
        %763 = vmax.xlane.f32.xlu0 %v708
        %v764 = vpop.xlane.xlu0 %763
        %765 = vmax.xlane.f32.xlu0 %v709
        %v766 = vpop.xlane.xlu0 %765
        %767 = vmax.xlane.f32.xlu0 %v710
        %v768 = vpop.xlane.xlu0 %767
        %769 = vmax.xlane.f32.xlu0 %v711
        %v770 = vpop.xlane.xlu0 %769
        %771 = vmax.xlane.f32.xlu0 %v712
        %v772 = vpop.xlane.xlu0 %771
        %773 = vmax.xlane.f32.xlu0 %v713
        %v774 = vpop.xlane.xlu0 %773
        %775 = vmax.xlane.f32.xlu0 %v714
        %v776 = vpop.xlane.xlu0 %775
        %777 = vmax.xlane.f32.xlu0 %v715
        %v778 = vpop.xlane.xlu0 %777
        %779 = vmax.xlane.f32.xlu0 %v716
        %v780 = vpop.xlane.xlu0 %779
        %v781 = vsub.f32 %v685, %v718
        %v782 = vsub.f32 %v686, %v720
        %v783 = vsub.f32 %v687, %v722
        %v784 = vsub.f32 %v688, %v724
        %v785 = vsub.f32 %v689, %v726
        %v786 = vsub.f32 %v690, %v728
        %v787 = vsub.f32 %v691, %v730
        %v788 = vsub.f32 %v692, %v732
        %v789 = vsub.f32 %v693, %v734
        %v790 = vsub.f32 %v694, %v736
        %v791 = vsub.f32 %v695, %v738
        %v792 = vsub.f32 %v696, %v740
        %v793 = vsub.f32 %v697, %v742
        %v794 = vsub.f32 %v698, %v744
        %v795 = vsub.f32 %v699, %v746
        %v796 = vsub.f32 %v700, %v748
        %v797 = vsub.f32 %v701, %v750
        %v798 = vsub.f32 %v702, %v752
        %v799 = vsub.f32 %v703, %v754
        %v800 = vsub.f32 %v704, %v756
        %v801 = vsub.f32 %v705, %v758
        %v802 = vsub.f32 %v706, %v760
        %v803 = vsub.f32 %v707, %v762
        %v804 = vsub.f32 %v708, %v764
        %v805 = vsub.f32 %v709, %v766
        %v806 = vsub.f32 %v710, %v768
        %v807 = vsub.f32 %v711, %v770
        %v808 = vsub.f32 %v712, %v772
        %v809 = vsub.f32 %v713, %v774
        %v810 = vsub.f32 %v714, %v776
        %v811 = vsub.f32 %v715, %v778
        %v812 = vsub.f32 %v716, %v780
        %v813 = vmul.f32 %v781, 1.442695
        %v814 = vpow.pop %v813
        %v815 = vmul.f32 %v782, 1.442695
        %v816 = vpow.pop %v815
        %v817 = vmul.f32 %v783, 1.442695
        %v818 = vpow.pop %v817
        %v819 = vmul.f32 %v784, 1.442695
        %v820 = vpow.pop %v819
        %v821 = vmul.f32 %v785, 1.442695
        %v822 = vpow.pop %v821
        %v823 = vmul.f32 %v786, 1.442695
        %v824 = vpow.pop %v823
        %v825 = vmul.f32 %v787, 1.442695
        %v826 = vpow.pop %v825
        %v827 = vmul.f32 %v788, 1.442695
        %v828 = vpow.pop %v827
        %v829 = vmul.f32 %v789, 1.442695
        %v830 = vpow.pop %v829
        %v831 = vmul.f32 %v790, 1.442695
        %v832 = vpow.pop %v831
        %v833 = vmul.f32 %v791, 1.442695
        %v834 = vpow.pop %v833
        %v835 = vmul.f32 %v792, 1.442695
        %v836 = vpow.pop %v835
        %v837 = vmul.f32 %v793, 1.442695
        %v838 = vpow.pop %v837
        %v839 = vmul.f32 %v794, 1.442695
        %v840 = vpow.pop %v839
        %v841 = vmul.f32 %v795, 1.442695
        %v842 = vpow.pop %v841
        %v843 = vmul.f32 %v796, 1.442695
        %v844 = vpow.pop %v843
        %v845 = vmul.f32 %v797, 1.442695
        %v846 = vpow.pop %v845
        %v847 = vmul.f32 %v798, 1.442695
        %v848 = vpow.pop %v847
        %v849 = vmul.f32 %v799, 1.442695
        %v850 = vpow.pop %v849
        %v851 = vmul.f32 %v800, 1.442695
        %v852 = vpow.pop %v851
        %v853 = vmul.f32 %v801, 1.442695
        %v854 = vpow.pop %v853
        %v855 = vmul.f32 %v802, 1.442695
        %v856 = vpow.pop %v855
        %v857 = vmul.f32 %v803, 1.442695
        %v858 = vpow.pop %v857
        %v859 = vmul.f32 %v804, 1.442695
        %v860 = vpow.pop %v859
        %v861 = vmul.f32 %v805, 1.442695
        %v862 = vpow.pop %v861
        %v863 = vmul.f32 %v806, 1.442695
        %v864 = vpow.pop %v863
        %v865 = vmul.f32 %v807, 1.442695
        %v866 = vpow.pop %v865
        %v867 = vmul.f32 %v808, 1.442695
        %v868 = vpow.pop %v867
        %v869 = vmul.f32 %v809, 1.442695
        %v870 = vpow.pop %v869
        %v871 = vmul.f32 %v810, 1.442695
        %v872 = vpow.pop %v871
        %v873 = vmul.f32 %v811, 1.442695
        %v874 = vpow.pop %v873
        %v875 = vmul.f32 %v812, 1.442695
        %v876 = vpow.pop %v875
        %877 = vadd.xlane.f32.xlu0 %v814
        %v878 = vpop.xlane.xlu0 %877
        %879 = vadd.xlane.f32.xlu0 %v816
        %v880 = vpop.xlane.xlu0 %879
        %881 = vadd.xlane.f32.xlu0 %v818
        %v882 = vpop.xlane.xlu0 %881
        %883 = vadd.xlane.f32.xlu0 %v820
        %v884 = vpop.xlane.xlu0 %883
        %885 = vadd.xlane.f32.xlu0 %v822
        %v886 = vpop.xlane.xlu0 %885
        %887 = vadd.xlane.f32.xlu0 %v824
        %v888 = vpop.xlane.xlu0 %887
        %889 = vadd.xlane.f32.xlu0 %v826
        %v890 = vpop.xlane.xlu0 %889
        %891 = vadd.xlane.f32.xlu0 %v828
        %v892 = vpop.xlane.xlu0 %891
        %893 = vadd.xlane.f32.xlu0 %v830
        %v894 = vpop.xlane.xlu0 %893
        %895 = vadd.xlane.f32.xlu0 %v832
        %v896 = vpop.xlane.xlu0 %895
        %897 = vadd.xlane.f32.xlu0 %v834
        %v898 = vpop.xlane.xlu0 %897
        %899 = vadd.xlane.f32.xlu0 %v836
        %v900 = vpop.xlane.xlu0 %899
        %901 = vadd.xlane.f32.xlu0 %v838
        %v902 = vpop.xlane.xlu0 %901
        %903 = vadd.xlane.f32.xlu0 %v840
        %v904 = vpop.xlane.xlu0 %903
        %905 = vadd.xlane.f32.xlu0 %v842
        %v906 = vpop.xlane.xlu0 %905
        %907 = vadd.xlane.f32.xlu0 %v844
        %v908 = vpop.xlane.xlu0 %907
        %909 = vadd.xlane.f32.xlu0 %v846
        %v910 = vpop.xlane.xlu0 %909
        %911 = vadd.xlane.f32.xlu0 %v848
        %v912 = vpop.xlane.xlu0 %911
        %913 = vadd.xlane.f32.xlu0 %v850
        %v914 = vpop.xlane.xlu0 %913
        %915 = vadd.xlane.f32.xlu0 %v852
        %v916 = vpop.xlane.xlu0 %915
        %917 = vadd.xlane.f32.xlu0 %v854
        %v918 = vpop.xlane.xlu0 %917
        %919 = vadd.xlane.f32.xlu0 %v856
        %v920 = vpop.xlane.xlu0 %919
        %921 = vadd.xlane.f32.xlu0 %v858
        %v922 = vpop.xlane.xlu0 %921
        %923 = vadd.xlane.f32.xlu0 %v860
        %v924 = vpop.xlane.xlu0 %923
        %925 = vadd.xlane.f32.xlu0 %v862
        %v926 = vpop.xlane.xlu0 %925
        %927 = vadd.xlane.f32.xlu0 %v864
        %v928 = vpop.xlane.xlu0 %927
        %929 = vadd.xlane.f32.xlu0 %v866
        %v930 = vpop.xlane.xlu0 %929
        %931 = vadd.xlane.f32.xlu0 %v868
        %v932 = vpop.xlane.xlu0 %931
        %933 = vadd.xlane.f32.xlu0 %v870
        %v934 = vpop.xlane.xlu0 %933
        %935 = vadd.xlane.f32.xlu0 %v872
        %v936 = vpop.xlane.xlu0 %935
        %937 = vadd.xlane.f32.xlu0 %v874
        %v938 = vpop.xlane.xlu0 %937
        %939 = vadd.xlane.f32.xlu0 %v876
        %v940 = vpop.xlane.xlu0 %939
        %v941 = vlog2.pop %v878
        %v942 = vmul.f32 %v941, 0.6931472
        %v943 = vlog2.pop %v880
        %v944 = vmul.f32 %v943, 0.6931472
        %v945 = vlog2.pop %v882
        %v946 = vmul.f32 %v945, 0.6931472
        %v947 = vlog2.pop %v884
        %v948 = vmul.f32 %v947, 0.6931472
        %v949 = vlog2.pop %v886
        %v950 = vmul.f32 %v949, 0.6931472
        %v951 = vlog2.pop %v888
        %v952 = vmul.f32 %v951, 0.6931472
        %v953 = vlog2.pop %v890
        %v954 = vmul.f32 %v953, 0.6931472
        %v955 = vlog2.pop %v892
        %v956 = vmul.f32 %v955, 0.6931472
        %v957 = vlog2.pop %v894
        %v958 = vmul.f32 %v957, 0.6931472
        %v959 = vlog2.pop %v896
        %v960 = vmul.f32 %v959, 0.6931472
        %v961 = vlog2.pop %v898
        %v962 = vmul.f32 %v961, 0.6931472
        %v963 = vlog2.pop %v900
        %v964 = vmul.f32 %v963, 0.6931472
        %v965 = vlog2.pop %v902
        %v966 = vmul.f32 %v965, 0.6931472
        %v967 = vlog2.pop %v904
        %v968 = vmul.f32 %v967, 0.6931472
        %v969 = vlog2.pop %v906
        %v970 = vmul.f32 %v969, 0.6931472
        %v971 = vlog2.pop %v908
        %v972 = vmul.f32 %v971, 0.6931472
        %v973 = vlog2.pop %v910
        %v974 = vmul.f32 %v973, 0.6931472
        %v975 = vlog2.pop %v912
        %v976 = vmul.f32 %v975, 0.6931472
        %v977 = vlog2.pop %v914
        %v978 = vmul.f32 %v977, 0.6931472
        %v979 = vlog2.pop %v916
        %v980 = vmul.f32 %v979, 0.6931472
        %v981 = vlog2.pop %v918
        %v982 = vmul.f32 %v981, 0.6931472
        %v983 = vlog2.pop %v920
        %v984 = vmul.f32 %v983, 0.6931472
        %v985 = vlog2.pop %v922
        %v986 = vmul.f32 %v985, 0.6931472
        %v987 = vlog2.pop %v924
        %v988 = vmul.f32 %v987, 0.6931472
        %v989 = vlog2.pop %v926
        %v990 = vmul.f32 %v989, 0.6931472
        %v991 = vlog2.pop %v928
        %v992 = vmul.f32 %v991, 0.6931472
        %v993 = vlog2.pop %v930
        %v994 = vmul.f32 %v993, 0.6931472
        %v995 = vlog2.pop %v932
        %v996 = vmul.f32 %v995, 0.6931472
        %v997 = vlog2.pop %v934
        %v998 = vmul.f32 %v997, 0.6931472
        %v999 = vlog2.pop %v936
        %v1000 = vmul.f32 %v999, 0.6931472
        %v1001 = vlog2.pop %v938
        %v1002 = vmul.f32 %v1001, 0.6931472
        %v1003 = vlog2.pop %v940
        %v1004 = vmul.f32 %v1003, 0.6931472
        %v1005 = vsub.f32 %v781, %v942
        %v1006 = vsub.f32 %v782, %v944
        %v1007 = vsub.f32 %v783, %v946
        %v1008 = vsub.f32 %v784, %v948
        %v1009 = vsub.f32 %v785, %v950
        %v1010 = vsub.f32 %v786, %v952
        %v1011 = vsub.f32 %v787, %v954
        %v1012 = vsub.f32 %v788, %v956
        %v1013 = vsub.f32 %v789, %v958
        %v1014 = vsub.f32 %v790, %v960
        %v1015 = vsub.f32 %v791, %v962
        %v1016 = vsub.f32 %v792, %v964
        %v1017 = vsub.f32 %v793, %v966
        %v1018 = vsub.f32 %v794, %v968
        %v1019 = vsub.f32 %v795, %v970
        %v1020 = vsub.f32 %v796, %v972
        %v1021 = vsub.f32 %v797, %v974
        %v1022 = vsub.f32 %v798, %v976
        %v1023 = vsub.f32 %v799, %v978
        %v1024 = vsub.f32 %v800, %v980
        %v1025 = vsub.f32 %v801, %v982
        %v1026 = vsub.f32 %v802, %v984
        %v1027 = vsub.f32 %v803, %v986
        %v1028 = vsub.f32 %v804, %v988
        %v1029 = vsub.f32 %v805, %v990
        %v1030 = vsub.f32 %v806, %v992
        %v1031 = vsub.f32 %v807, %v994
        %v1032 = vsub.f32 %v808, %v996
        %v1033 = vsub.f32 %v809, %v998
        %v1034 = vsub.f32 %v810, %v1000
        %v1035 = vsub.f32 %v811, %v1002
        %v1036 = vsub.f32 %v812, %v1004
        %1037 = vst [vmem:[%s181] sm:$0xff] %v1005
        %1038 = vst [vmem:[%s181 + $0x8] sm:$0xff] %v1006
        %1039 = vst [vmem:[%s181 + $0x10] sm:$0xff] %v1007
        %1040 = vst [vmem:[%s181 + $0x18] sm:$0xff] %v1008
        %1041 = vst [vmem:[%s181 + $0x20] sm:$0xff] %v1009
        %1042 = vst [vmem:[%s181 + $0x28] sm:$0xff] %v1010
        %1043 = vst [vmem:[%s181 + $0x30] sm:$0xff] %v1011
        %1044 = vst [vmem:[%s181 + $0x38] sm:$0xff] %v1012
        %1045 = vst [vmem:[%s181 + $0x40] sm:$0xff] %v1013
        %1046 = vst [vmem:[%s181 + $0x48] sm:$0xff] %v1014
        %1047 = vst [vmem:[%s181 + $0x50] sm:$0xff] %v1015
        %1048 = vst [vmem:[%s181 + $0x58] sm:$0xff] %v1016
        %1049 = vst [vmem:[%s181 + $0x60] sm:$0xff] %v1017
        %1050 = vst [vmem:[%s181 + $0x68] sm:$0xff] %v1018
        %1051 = vst [vmem:[%s181 + $0x70] sm:$0xff] %v1019
        %1052 = vst [vmem:[%s181 + $0x78] sm:$0xff] %v1020
        %1053 = vst [vmem:[%s181 + $0x80] sm:$0xff] %v1021
        %1054 = vst [vmem:[%s181 + $0x88] sm:$0xff] %v1022
        %1055 = vst [vmem:[%s181 + $0x90] sm:$0xff] %v1023
        %1056 = vst [vmem:[%s181 + $0x98] sm:$0xff] %v1024
        %1057 = vst [vmem:[%s181 + $0xa0] sm:$0xff] %v1025
        %1058 = vst [vmem:[%s181 + $0xa8] sm:$0xff] %v1026
        %1059 = vst [vmem:[%s181 + $0xb0] sm:$0xff] %v1027
        %1060 = vst [vmem:[%s181 + $0xb8] sm:$0xff] %v1028
        %1061 = vst [vmem:[%s181 + $0xc0] sm:$0xff] %v1029
        %1062 = vst [vmem:[%s181 + $0xc8] sm:$0xff] %v1030
        %1063 = vst [vmem:[%s181 + $0xd0] sm:$0xff] %v1031
        %1064 = vst [vmem:[%s181 + $0xd8] sm:$0xff] %v1032
        %1065 = vst [vmem:[%s181 + $0xe0] sm:$0xff] %v1033
        %1066 = vst [vmem:[%s181 + $0xe8] sm:$0xff] %v1034
        %1067 = vst [vmem:[%s181 + $0xf0] sm:$0xff] %v1035
        %1068 = vst [vmem:[%s181 + $0xf8] sm:$0xff] %v1036
        %s1069 = sand.u32 %s75, 1
        %s1070 = scalar_lea.sflag [#allocation4], %s1069
        %s1071 = sand.u32 %s75, 1
        %s1072 = smul.addr %s1071, 256
        %s1073 = scalar_lea.vmem [#allocation7], %s1072
        // Predicated region
        $region37: #{tpu_custom_call.1} parent=27 // pred_check
          %p1074 = pneg %p85
        $region38: #{tpu_custom_call.1} parent=27 // pred_check_branch
          %1076 = sbr.rel (%p1074) target = $region40
        $region39: #{tpu_custom_call.1} parent=27 // pred_region
          %s1077 = smul.u32 32, %s20
          %1079 = vsyncadd %s1070, 0
          %s1080 = smul.addr %s1077, 8
          %s1081 = scalar_lea.hbm %s2, %s1080
          %s1082 = sshll.u32 %s1073, 4
          %s1083 = int_to_ptr.vmem [resolvable:$true] %s1082
          %s1084 = sshll.u32 %s1081, 4
          %s1085 = int_to_ptr.hbm [resolvable:$true] %s1084
          %1090 = dma.vmem_to_hbm [thread:$0]  %s1083, 4096, %s1085, %s1070, 128, 128, 8
        $region40: #{tpu_custom_call.1} parent=27 // pred_fallthru
          _
      $region28: #{tpu_custom_call.1} parent=5 // pred_fallthru
        _
      %p1091 = scmp.le.s32.totalorder 2, %s15
      // Predicated region
      $region41: #{tpu_custom_call.1} parent=5 // pred_check
        %p1092 = pneg %p1091
      $region42: #{tpu_custom_call.1} parent=5 // pred_check_branch
        %1094 = sbr.rel (%p1092) target = $region44
      $region43: #{tpu_custom_call.1} parent=5 // pred_region
        %s1095 = ssub.s32 %s15, 2
        // Predicated region
        $region45: #{tpu_custom_call.1} parent=43 // pred_check
          %p1096 = pneg %p91
        $region46: #{tpu_custom_call.1} parent=43 // pred_check_branch
          %1098 = sbr.rel (%p1096) target = $region48
        $region47: #{tpu_custom_call.1} parent=43 // pred_region
          %s1099 = sand.u32 %s76, 1
          %s1100 = scalar_lea.sflag [#allocation4], %s1099
          %s1101 = sand.u32 %s76, 1
          %s1102 = smul.addr %s1101, 256
          %s1103 = scalar_lea.vmem [#allocation7], %s1102
          %1105 = dma.done %s1100, 4096
        $region48: #{tpu_custom_call.1} parent=43 // pred_fallthru
          _
      $region44: #{tpu_custom_call.1} parent=5 // pred_fallthru
        _
    $region6: #{tpu_custom_call.1} parent=1 // loop_footer
      %s19 = sadd.s32 1, %s15
    $region7: #{tpu_custom_call.1} parent=1 // loop_footer_branch
      %14 = sbr.rel target = $region3
    $region8: #{tpu_custom_call.1} parent=1 // loop_exit
      _
    %1106 = vsyncpa [#allocation3], 1
    %s1107 = scalar_lea.sflag [#allocation3], 1
    %1108 = vsyncpa %s1107, 1
    %1109 = vsyncpa [#allocation6], 1
    %1110 = vsyncpa [#allocation4], 1
    %s1111 = scalar_lea.sflag [#allocation4], 1
    %1112 = vsyncpa %s1111, 1

</llo_original>
